<compile_context>
chip_gen: v5e
topology: v5e:2x2
jax: 0.10.0
libtpu: 0.0.40
codegen_flags: <defaults>
</compile_context>

<pallas_src>
import jax
import jax.numpy as jnp
from jax.experimental import pallas as pl
from jax.experimental.pallas import tpu as pltpu


KS = 5                 # SA default kernel_size
PAD = (KS - 1) // 2    # = 2


# ---------------------------------------------------------------------------
# Fused kernel: one image (NCHW) per grid step.
# ---------------------------------------------------------------------------
def _sa_kernel(x_ref, w_ref, o_ref, plane_ref):
    # x_ref     : (1, C, H, W)                 input image tile (VMEM)
    # w_ref     : (2*KS*KS,)                   flattened conv weight, order [ci, kh, kw] (SMEM)
    # o_ref     : (1, C, H, W)                 output tile (VMEM)
    # plane_ref : (2, H+2*PAD, W+2*PAD)        VMEM scratch for zero-padded pooled planes
    C = x_ref.shape[1]
    H = o_ref.shape[2]
    W = o_ref.shape[3]

    x = x_ref[0]                                   # (C, H, W) float32

    # ---- ChannelPool: max / mean over the channel axis (cheap per-lane VPU ops) ----
    mx = jnp.max(x, axis=0)                        # (H, W)
    mn = jnp.sum(x, axis=0) * (1.0 / C)            # (H, W)

    # ---- zero-pad pooled planes inside VMEM (no HBM padding round trip) ----
    plane_ref[...] = jnp.zeros_like(plane_ref)
    plane_ref[0, PAD:PAD + H, PAD:PAD + W] = mx
    plane_ref[1, PAD:PAD + H, PAD:PAD + W] = mn

    # ---- 5x5 conv, 2 in-channels -> 1 out-channel, no bias ----
    # 50 scalar-weight x shifted-plane fused multiply-adds on the VPU.
    acc = jnp.zeros((H, W), jnp.float32)
    for ci in range(2):
        for kh in range(KS):
            for kw in range(KS):
                wv = w_ref[ci * KS * KS + kh * KS + kw]          # scalar from SMEM
                acc = acc + wv * plane_ref[ci, kh:kh + H, kw:kw + W]

    # ---- sigmoid gate and elementwise scaling of the original input ----
    scale = 1.0 / (1.0 + jnp.exp(-acc))            # (H, W)
    o_ref[0] = (x * scale[None, :, :]).astype(o_ref.dtype)


# ---------------------------------------------------------------------------
# Wrapper: accepts NCHW input and PyTorch-layout OIHW conv weight (1, 2, KS, KS).
# ---------------------------------------------------------------------------
def sa_forward(x_nchw, conv_weight):
    N, C, H, W = x_nchw.shape
    w_flat = conv_weight.reshape(-1).astype(jnp.float32)      # (2*KS*KS,)
    return pl.pallas_call(
        _sa_kernel,
        out_shape=jax.ShapeDtypeStruct((N, C, H, W), x_nchw.dtype),
        grid=(N,),
        in_specs=[
            pl.BlockSpec((1, C, H, W), lambda n: (n, 0, 0, 0)),
            pl.BlockSpec(memory_space=pltpu.MemorySpace.SMEM),   # whole weight in SMEM
        ],
        out_specs=pl.BlockSpec((1, C, H, W), lambda n: (n, 0, 0, 0)),
        scratch_shapes=[pltpu.VMEM((2, H + 2 * PAD, W + 2 * PAD), jnp.float32)],
        compiler_params=pltpu.CompilerParams(dimension_semantics=("parallel",)),
    )(x_nchw, w_flat)


# ---------------------------------------------------------------------------
# Pure-JAX reference mirroring the PyTorch SA.forward (for correctness check).
# ---------------------------------------------------------------------------
def sa_reference(x, weight):
    mx = jnp.max(x, axis=1, keepdims=True)
    mn = jnp.mean(x, axis=1, keepdims=True)
    xc = jnp.concatenate([mx, mn], axis=1)                       # (N, 2, H, W)
    y = jax.lax.conv_general_dilated(
        xc, weight, window_strides=(1, 1),
        padding=((PAD, PAD), (PAD, PAD)),
        dimension_numbers=("NCHW", "OIHW", "NCHW"))              # (N, 1, H, W)
    return x * jax.nn.sigmoid(y)


if __name__ == "__main__":
    N, C, H, W = 2, 4, 16, 16

    key = jax.random.PRNGKey(0)
    kx, kw = jax.random.split(key)
    x = jax.random.normal(kx, (N, C, H, W), jnp.float32)
    # PyTorch Conv2d(2, 1, 5, bias=False) default init: U(-b, b), b = 1/sqrt(2*5*5)
    bound = 1.0 / float(2 * KS * KS) ** 0.5
    weight = jax.random.uniform(kw, (1, 2, KS, KS), jnp.float32, -bound, bound)  # OIHW

    out = jax.block_until_ready(sa_forward(x, weight))
    ref = jax.block_until_ready(sa_reference(x, weight))

    assert out.shape == (N, C, H, W)
    assert jnp.allclose(out, ref, atol=1e-5, rtol=1e-4), "mismatch vs reference"

    print("KERNEL_OK")
</pallas_src>

<mosaic_0001>
module attributes {stable_mosaic.version = 11 : i64} {
  func.func @_sa_kernel(%arg0: i32, %arg1: memref<1x4x16x16xf32, #tpu.memory_space<vmem>>, %arg2: memref<50xf32, #tpu.memory_space<smem>>, %arg3: memref<1x4x16x16xf32, #tpu.memory_space<vmem>>, %arg4: memref<2x20x20xf32, #tpu.memory_space<vmem>>) attributes {dimension_semantics = [#tpu.dimension_semantics<parallel>], iteration_bounds = array<i64: 2>, scalar_prefetch = 0 : i64, scratch_operands = 1 : i64, tpu.core_type = #tpu.core_type<tc>, window_params = [{transform_indices = @transform_0, window_bounds = array<i64: 1, 4, 16, 16>}, {transform_indices = @transform_1, window_bounds = array<i64: 50>}, {transform_indices = @transform_2, window_bounds = array<i64: 1, 4, 16, 16>}]} {
    %c0 = arith.constant 0 : index
    %c0_0 = arith.constant 0 : index
    %c0_1 = arith.constant 0 : index
    %c0_2 = arith.constant 0 : index
    %0 = vector.load %arg1[%c0, %c0_0, %c0_1, %c0_2] : memref<1x4x16x16xf32, #tpu.memory_space<vmem>>, vector<1x4x16x16xf32>
    %1 = vector.shape_cast %0 : vector<1x4x16x16xf32> to vector<4x16x16xf32>
    %cst = arith.constant dense<0xFF800000> : vector<16x16xf32>
    %2 = vector.multi_reduction <maximumf>, %1, %cst [0] : vector<4x16x16xf32> to vector<16x16xf32>
    %cst_3 = arith.constant dense<0.000000e+00> : vector<16x16xf32>
    %3 = vector.multi_reduction <add>, %1, %cst_3 [0] : vector<4x16x16xf32> to vector<16x16xf32>
    %cst_4 = arith.constant 2.500000e-01 : f32
    %4 = vector.broadcast %cst_4 : f32 to vector<16x16xf32>
    %5 = arith.mulf %3, %4 : vector<16x16xf32>
    %cst_5 = arith.constant 0.000000e+00 : f32
    %6 = vector.broadcast %cst_5 : f32 to vector<2x20x20xf32>
    %c0_6 = arith.constant 0 : index
    %c0_7 = arith.constant 0 : index
    %c0_8 = arith.constant 0 : index
    %7 = vector.load %arg4[%c0_6, %c0_7, %c0_8] : memref<2x20x20xf32, #tpu.memory_space<vmem>>, vector<2x20x20xf32>
    tpu.vector_store %arg4[%c0_6, %c0_7, %c0_8], %6 {strides = array<i32>} : memref<2x20x20xf32, #tpu.memory_space<vmem>>, vector<2x20x20xf32>,
    %c0_9 = arith.constant 0 : index
    %c2 = arith.constant 2 : index
    %c2_10 = arith.constant 2 : index
    %8 = vector.load %arg4[%c0_9, %c2, %c2_10] : memref<2x20x20xf32, #tpu.memory_space<vmem>>, vector<1x16x16xf32>
    %9 = vector.shape_cast %8 : vector<1x16x16xf32> to vector<16x16xf32>
    %10 = vector.shape_cast %2 : vector<16x16xf32> to vector<1x16x16xf32>
    tpu.vector_store %arg4[%c0_9, %c2, %c2_10], %10 {strides = array<i32>} : memref<2x20x20xf32, #tpu.memory_space<vmem>>, vector<1x16x16xf32>,
    %c1 = arith.constant 1 : index
    %c2_11 = arith.constant 2 : index
    %c2_12 = arith.constant 2 : index
    %11 = vector.load %arg4[%c1, %c2_11, %c2_12] : memref<2x20x20xf32, #tpu.memory_space<vmem>>, vector<1x16x16xf32>
    %12 = vector.shape_cast %11 : vector<1x16x16xf32> to vector<16x16xf32>
    %13 = vector.shape_cast %5 : vector<16x16xf32> to vector<1x16x16xf32>
    tpu.vector_store %arg4[%c1, %c2_11, %c2_12], %13 {strides = array<i32>} : memref<2x20x20xf32, #tpu.memory_space<vmem>>, vector<1x16x16xf32>,
    %cst_13 = arith.constant 0.000000e+00 : f32
    %14 = vector.broadcast %cst_13 : f32 to vector<16x16xf32>
    %c0_14 = arith.constant 0 : index
    %15 = memref.load %arg2[%c0_14] : memref<50xf32, #tpu.memory_space<smem>>
    %c0_15 = arith.constant 0 : index
    %c0_16 = arith.constant 0 : index
    %c0_17 = arith.constant 0 : index
    %16 = vector.load %arg4[%c0_15, %c0_16, %c0_17] : memref<2x20x20xf32, #tpu.memory_space<vmem>>, vector<1x16x16xf32>
    %17 = vector.shape_cast %16 : vector<1x16x16xf32> to vector<16x16xf32>
    %18 = vector.broadcast %15 : f32 to vector<16x16xf32>
    %19 = arith.mulf %18, %17 : vector<16x16xf32>
    %20 = arith.addf %14, %19 : vector<16x16xf32>
    %c1_18 = arith.constant 1 : index
    %21 = memref.load %arg2[%c1_18] : memref<50xf32, #tpu.memory_space<smem>>
    %c0_19 = arith.constant 0 : index
    %c0_20 = arith.constant 0 : index
    %c1_21 = arith.constant 1 : index
    %22 = vector.load %arg4[%c0_19, %c0_20, %c1_21] : memref<2x20x20xf32, #tpu.memory_space<vmem>>, vector<1x16x16xf32>
    %23 = vector.shape_cast %22 : vector<1x16x16xf32> to vector<16x16xf32>
    %24 = vector.broadcast %21 : f32 to vector<16x16xf32>
    %25 = arith.mulf %24, %23 : vector<16x16xf32>
    %26 = arith.addf %20, %25 : vector<16x16xf32>
    %c2_22 = arith.constant 2 : index
    %27 = memref.load %arg2[%c2_22] : memref<50xf32, #tpu.memory_space<smem>>
    %c0_23 = arith.constant 0 : index
    %c0_24 = arith.constant 0 : index
    %c2_25 = arith.constant 2 : index
    %28 = vector.load %arg4[%c0_23, %c0_24, %c2_25] : memref<2x20x20xf32, #tpu.memory_space<vmem>>, vector<1x16x16xf32>
    %29 = vector.shape_cast %28 : vector<1x16x16xf32> to vector<16x16xf32>
    %30 = vector.broadcast %27 : f32 to vector<16x16xf32>
    %31 = arith.mulf %30, %29 : vector<16x16xf32>
    %32 = arith.addf %26, %31 : vector<16x16xf32>
    %c3 = arith.constant 3 : index
    %33 = memref.load %arg2[%c3] : memref<50xf32, #tpu.memory_space<smem>>
    %c0_26 = arith.constant 0 : index
    %c0_27 = arith.constant 0 : index
    %c3_28 = arith.constant 3 : index
    %34 = vector.load %arg4[%c0_26, %c0_27, %c3_28] : memref<2x20x20xf32, #tpu.memory_space<vmem>>, vector<1x16x16xf32>
    %35 = vector.shape_cast %34 : vector<1x16x16xf32> to vector<16x16xf32>
    %36 = vector.broadcast %33 : f32 to vector<16x16xf32>
    %37 = arith.mulf %36, %35 : vector<16x16xf32>
    %38 = arith.addf %32, %37 : vector<16x16xf32>
    %c4 = arith.constant 4 : index
    %39 = memref.load %arg2[%c4] : memref<50xf32, #tpu.memory_space<smem>>
    %c0_29 = arith.constant 0 : index
    %c0_30 = arith.constant 0 : index
    %c4_31 = arith.constant 4 : index
    %40 = vector.load %arg4[%c0_29, %c0_30, %c4_31] : memref<2x20x20xf32, #tpu.memory_space<vmem>>, vector<1x16x16xf32>
    %41 = vector.shape_cast %40 : vector<1x16x16xf32> to vector<16x16xf32>
    %42 = vector.broadcast %39 : f32 to vector<16x16xf32>
    %43 = arith.mulf %42, %41 : vector<16x16xf32>
    %44 = arith.addf %38, %43 : vector<16x16xf32>
    %c5 = arith.constant 5 : index
    %45 = memref.load %arg2[%c5] : memref<50xf32, #tpu.memory_space<smem>>
    %c0_32 = arith.constant 0 : index
    %c1_33 = arith.constant 1 : index
    %c0_34 = arith.constant 0 : index
    %46 = vector.load %arg4[%c0_32, %c1_33, %c0_34] : memref<2x20x20xf32, #tpu.memory_space<vmem>>, vector<1x16x16xf32>
    %47 = vector.shape_cast %46 : vector<1x16x16xf32> to vector<16x16xf32>
    %48 = vector.broadcast %45 : f32 to vector<16x16xf32>
    %49 = arith.mulf %48, %47 : vector<16x16xf32>
    %50 = arith.addf %44, %49 : vector<16x16xf32>
    %c6 = arith.constant 6 : index
    %51 = memref.load %arg2[%c6] : memref<50xf32, #tpu.memory_space<smem>>
    %c0_35 = arith.constant 0 : index
    %c1_36 = arith.constant 1 : index
    %c1_37 = arith.constant 1 : index
    %52 = vector.load %arg4[%c0_35, %c1_36, %c1_37] : memref<2x20x20xf32, #tpu.memory_space<vmem>>, vector<1x16x16xf32>
    %53 = vector.shape_cast %52 : vector<1x16x16xf32> to vector<16x16xf32>
    %54 = vector.broadcast %51 : f32 to vector<16x16xf32>
    %55 = arith.mulf %54, %53 : vector<16x16xf32>
    %56 = arith.addf %50, %55 : vector<16x16xf32>
    %c7 = arith.constant 7 : index
    %57 = memref.load %arg2[%c7] : memref<50xf32, #tpu.memory_space<smem>>
    %c0_38 = arith.constant 0 : index
    %c1_39 = arith.constant 1 : index
    %c2_40 = arith.constant 2 : index
    %58 = vector.load %arg4[%c0_38, %c1_39, %c2_40] : memref<2x20x20xf32, #tpu.memory_space<vmem>>, vector<1x16x16xf32>
    %59 = vector.shape_cast %58 : vector<1x16x16xf32> to vector<16x16xf32>
    %60 = vector.broadcast %57 : f32 to vector<16x16xf32>
    %61 = arith.mulf %60, %59 : vector<16x16xf32>
    %62 = arith.addf %56, %61 : vector<16x16xf32>
    %c8 = arith.constant 8 : index
    %63 = memref.load %arg2[%c8] : memref<50xf32, #tpu.memory_space<smem>>
    %c0_41 = arith.constant 0 : index
    %c1_42 = arith.constant 1 : index
    %c3_43 = arith.constant 3 : index
    %64 = vector.load %arg4[%c0_41, %c1_42, %c3_43] : memref<2x20x20xf32, #tpu.memory_space<vmem>>, vector<1x16x16xf32>
    %65 = vector.shape_cast %64 : vector<1x16x16xf32> to vector<16x16xf32>
    %66 = vector.broadcast %63 : f32 to vector<16x16xf32>
    %67 = arith.mulf %66, %65 : vector<16x16xf32>
    %68 = arith.addf %62, %67 : vector<16x16xf32>
    %c9 = arith.constant 9 : index
    %69 = memref.load %arg2[%c9] : memref<50xf32, #tpu.memory_space<smem>>
    %c0_44 = arith.constant 0 : index
    %c1_45 = arith.constant 1 : index
    %c4_46 = arith.constant 4 : index
    %70 = vector.load %arg4[%c0_44, %c1_45, %c4_46] : memref<2x20x20xf32, #tpu.memory_space<vmem>>, vector<1x16x16xf32>
    %71 = vector.shape_cast %70 : vector<1x16x16xf32> to vector<16x16xf32>
    %72 = vector.broadcast %69 : f32 to vector<16x16xf32>
    %73 = arith.mulf %72, %71 : vector<16x16xf32>
    %74 = arith.addf %68, %73 : vector<16x16xf32>
    %c10 = arith.constant 10 : index
    %75 = memref.load %arg2[%c10] : memref<50xf32, #tpu.memory_space<smem>>
    %c0_47 = arith.constant 0 : index
    %c2_48 = arith.constant 2 : index
    %c0_49 = arith.constant 0 : index
    %76 = vector.load %arg4[%c0_47, %c2_48, %c0_49] : memref<2x20x20xf32, #tpu.memory_space<vmem>>, vector<1x16x16xf32>
    %77 = vector.shape_cast %76 : vector<1x16x16xf32> to vector<16x16xf32>
    %78 = vector.broadcast %75 : f32 to vector<16x16xf32>
    %79 = arith.mulf %78, %77 : vector<16x16xf32>
    %80 = arith.addf %74, %79 : vector<16x16xf32>
    %c11 = arith.constant 11 : index
    %81 = memref.load %arg2[%c11] : memref<50xf32, #tpu.memory_space<smem>>
    %c0_50 = arith.constant 0 : index
    %c2_51 = arith.constant 2 : index
    %c1_52 = arith.constant 1 : index
    %82 = vector.load %arg4[%c0_50, %c2_51, %c1_52] : memref<2x20x20xf32, #tpu.memory_space<vmem>>, vector<1x16x16xf32>
    %83 = vector.shape_cast %82 : vector<1x16x16xf32> to vector<16x16xf32>
    %84 = vector.broadcast %81 : f32 to vector<16x16xf32>
    %85 = arith.mulf %84, %83 : vector<16x16xf32>
    %86 = arith.addf %80, %85 : vector<16x16xf32>
    %c12 = arith.constant 12 : index
    %87 = memref.load %arg2[%c12] : memref<50xf32, #tpu.memory_space<smem>>
    %c0_53 = arith.constant 0 : index
    %c2_54 = arith.constant 2 : index
    %c2_55 = arith.constant 2 : index
    %88 = vector.load %arg4[%c0_53, %c2_54, %c2_55] : memref<2x20x20xf32, #tpu.memory_space<vmem>>, vector<1x16x16xf32>
    %89 = vector.shape_cast %88 : vector<1x16x16xf32> to vector<16x16xf32>
    %90 = vector.broadcast %87 : f32 to vector<16x16xf32>
    %91 = arith.mulf %90, %89 : vector<16x16xf32>
    %92 = arith.addf %86, %91 : vector<16x16xf32>
    %c13 = arith.constant 13 : index
    %93 = memref.load %arg2[%c13] : memref<50xf32, #tpu.memory_space<smem>>
    %c0_56 = arith.constant 0 : index
    %c2_57 = arith.constant 2 : index
    %c3_58 = arith.constant 3 : index
    %94 = vector.load %arg4[%c0_56, %c2_57, %c3_58] : memref<2x20x20xf32, #tpu.memory_space<vmem>>, vector<1x16x16xf32>
    %95 = vector.shape_cast %94 : vector<1x16x16xf32> to vector<16x16xf32>
    %96 = vector.broadcast %93 : f32 to vector<16x16xf32>
    %97 = arith.mulf %96, %95 : vector<16x16xf32>
    %98 = arith.addf %92, %97 : vector<16x16xf32>
    %c14 = arith.constant 14 : index
    %99 = memref.load %arg2[%c14] : memref<50xf32, #tpu.memory_space<smem>>
    %c0_59 = arith.constant 0 : index
    %c2_60 = arith.constant 2 : index
    %c4_61 = arith.constant 4 : index
    %100 = vector.load %arg4[%c0_59, %c2_60, %c4_61] : memref<2x20x20xf32, #tpu.memory_space<vmem>>, vector<1x16x16xf32>
    %101 = vector.shape_cast %100 : vector<1x16x16xf32> to vector<16x16xf32>
    %102 = vector.broadcast %99 : f32 to vector<16x16xf32>
    %103 = arith.mulf %102, %101 : vector<16x16xf32>
    %104 = arith.addf %98, %103 : vector<16x16xf32>
    %c15 = arith.constant 15 : index
    %105 = memref.load %arg2[%c15] : memref<50xf32, #tpu.memory_space<smem>>
    %c0_62 = arith.constant 0 : index
    %c3_63 = arith.constant 3 : index
    %c0_64 = arith.constant 0 : index
    %106 = vector.load %arg4[%c0_62, %c3_63, %c0_64] : memref<2x20x20xf32, #tpu.memory_space<vmem>>, vector<1x16x16xf32>
    %107 = vector.shape_cast %106 : vector<1x16x16xf32> to vector<16x16xf32>
    %108 = vector.broadcast %105 : f32 to vector<16x16xf32>
    %109 = arith.mulf %108, %107 : vector<16x16xf32>
    %110 = arith.addf %104, %109 : vector<16x16xf32>
    %c16 = arith.constant 16 : index
    %111 = memref.load %arg2[%c16] : memref<50xf32, #tpu.memory_space<smem>>
    %c0_65 = arith.constant 0 : index
    %c3_66 = arith.constant 3 : index
    %c1_67 = arith.constant 1 : index
    %112 = vector.load %arg4[%c0_65, %c3_66, %c1_67] : memref<2x20x20xf32, #tpu.memory_space<vmem>>, vector<1x16x16xf32>
    %113 = vector.shape_cast %112 : vector<1x16x16xf32> to vector<16x16xf32>
    %114 = vector.broadcast %111 : f32 to vector<16x16xf32>
    %115 = arith.mulf %114, %113 : vector<16x16xf32>
    %116 = arith.addf %110, %115 : vector<16x16xf32>
    %c17 = arith.constant 17 : index
    %117 = memref.load %arg2[%c17] : memref<50xf32, #tpu.memory_space<smem>>
    %c0_68 = arith.constant 0 : index
    %c3_69 = arith.constant 3 : index
    %c2_70 = arith.constant 2 : index
    %118 = vector.load %arg4[%c0_68, %c3_69, %c2_70] : memref<2x20x20xf32, #tpu.memory_space<vmem>>, vector<1x16x16xf32>
    %119 = vector.shape_cast %118 : vector<1x16x16xf32> to vector<16x16xf32>
    %120 = vector.broadcast %117 : f32 to vector<16x16xf32>
    %121 = arith.mulf %120, %119 : vector<16x16xf32>
    %122 = arith.addf %116, %121 : vector<16x16xf32>
    %c18 = arith.constant 18 : index
    %123 = memref.load %arg2[%c18] : memref<50xf32, #tpu.memory_space<smem>>
    %c0_71 = arith.constant 0 : index
    %c3_72 = arith.constant 3 : index
    %c3_73 = arith.constant 3 : index
    %124 = vector.load %arg4[%c0_71, %c3_72, %c3_73] : memref<2x20x20xf32, #tpu.memory_space<vmem>>, vector<1x16x16xf32>
    %125 = vector.shape_cast %124 : vector<1x16x16xf32> to vector<16x16xf32>
    %126 = vector.broadcast %123 : f32 to vector<16x16xf32>
    %127 = arith.mulf %126, %125 : vector<16x16xf32>
    %128 = arith.addf %122, %127 : vector<16x16xf32>
    %c19 = arith.constant 19 : index
    %129 = memref.load %arg2[%c19] : memref<50xf32, #tpu.memory_space<smem>>
    %c0_74 = arith.constant 0 : index
    %c3_75 = arith.constant 3 : index
    %c4_76 = arith.constant 4 : index
    %130 = vector.load %arg4[%c0_74, %c3_75, %c4_76] : memref<2x20x20xf32, #tpu.memory_space<vmem>>, vector<1x16x16xf32>
    %131 = vector.shape_cast %130 : vector<1x16x16xf32> to vector<16x16xf32>
    %132 = vector.broadcast %129 : f32 to vector<16x16xf32>
    %133 = arith.mulf %132, %131 : vector<16x16xf32>
    %134 = arith.addf %128, %133 : vector<16x16xf32>
    %c20 = arith.constant 20 : index
    %135 = memref.load %arg2[%c20] : memref<50xf32, #tpu.memory_space<smem>>
    %c0_77 = arith.constant 0 : index
    %c4_78 = arith.constant 4 : index
    %c0_79 = arith.constant 0 : index
    %136 = vector.load %arg4[%c0_77, %c4_78, %c0_79] : memref<2x20x20xf32, #tpu.memory_space<vmem>>, vector<1x16x16xf32>
    %137 = vector.shape_cast %136 : vector<1x16x16xf32> to vector<16x16xf32>
    %138 = vector.broadcast %135 : f32 to vector<16x16xf32>
    %139 = arith.mulf %138, %137 : vector<16x16xf32>
    %140 = arith.addf %134, %139 : vector<16x16xf32>
    %c21 = arith.constant 21 : index
    %141 = memref.load %arg2[%c21] : memref<50xf32, #tpu.memory_space<smem>>
    %c0_80 = arith.constant 0 : index
    %c4_81 = arith.constant 4 : index
    %c1_82 = arith.constant 1 : index
    %142 = vector.load %arg4[%c0_80, %c4_81, %c1_82] : memref<2x20x20xf32, #tpu.memory_space<vmem>>, vector<1x16x16xf32>
    %143 = vector.shape_cast %142 : vector<1x16x16xf32> to vector<16x16xf32>
    %144 = vector.broadcast %141 : f32 to vector<16x16xf32>
    %145 = arith.mulf %144, %143 : vector<16x16xf32>
    %146 = arith.addf %140, %145 : vector<16x16xf32>
    %c22 = arith.constant 22 : index
    %147 = memref.load %arg2[%c22] : memref<50xf32, #tpu.memory_space<smem>>
    %c0_83 = arith.constant 0 : index
    %c4_84 = arith.constant 4 : index
    %c2_85 = arith.constant 2 : index
    %148 = vector.load %arg4[%c0_83, %c4_84, %c2_85] : memref<2x20x20xf32, #tpu.memory_space<vmem>>, vector<1x16x16xf32>
    %149 = vector.shape_cast %148 : vector<1x16x16xf32> to vector<16x16xf32>
    %150 = vector.broadcast %147 : f32 to vector<16x16xf32>
    %151 = arith.mulf %150, %149 : vector<16x16xf32>
    %152 = arith.addf %146, %151 : vector<16x16xf32>
    %c23 = arith.constant 23 : index
    %153 = memref.load %arg2[%c23] : memref<50xf32, #tpu.memory_space<smem>>
    %c0_86 = arith.constant 0 : index
    %c4_87 = arith.constant 4 : index
    %c3_88 = arith.constant 3 : index
    %154 = vector.load %arg4[%c0_86, %c4_87, %c3_88] : memref<2x20x20xf32, #tpu.memory_space<vmem>>, vector<1x16x16xf32>
    %155 = vector.shape_cast %154 : vector<1x16x16xf32> to vector<16x16xf32>
    %156 = vector.broadcast %153 : f32 to vector<16x16xf32>
    %157 = arith.mulf %156, %155 : vector<16x16xf32>
    %158 = arith.addf %152, %157 : vector<16x16xf32>
    %c24 = arith.constant 24 : index
    %159 = memref.load %arg2[%c24] : memref<50xf32, #tpu.memory_space<smem>>
    %c0_89 = arith.constant 0 : index
    %c4_90 = arith.constant 4 : index
    %c4_91 = arith.constant 4 : index
    %160 = vector.load %arg4[%c0_89, %c4_90, %c4_91] : memref<2x20x20xf32, #tpu.memory_space<vmem>>, vector<1x16x16xf32>
    %161 = vector.shape_cast %160 : vector<1x16x16xf32> to vector<16x16xf32>
    %162 = vector.broadcast %159 : f32 to vector<16x16xf32>
    %163 = arith.mulf %162, %161 : vector<16x16xf32>
    %164 = arith.addf %158, %163 : vector<16x16xf32>
    %c25 = arith.constant 25 : index
    %165 = memref.load %arg2[%c25] : memref<50xf32, #tpu.memory_space<smem>>
    %c1_92 = arith.constant 1 : index
    %c0_93 = arith.constant 0 : index
    %c0_94 = arith.constant 0 : index
    %166 = vector.load %arg4[%c1_92, %c0_93, %c0_94] : memref<2x20x20xf32, #tpu.memory_space<vmem>>, vector<1x16x16xf32>
    %167 = vector.shape_cast %166 : vector<1x16x16xf32> to vector<16x16xf32>
    %168 = vector.broadcast %165 : f32 to vector<16x16xf32>
    %169 = arith.mulf %168, %167 : vector<16x16xf32>
    %170 = arith.addf %164, %169 : vector<16x16xf32>
    %c26 = arith.constant 26 : index
    %171 = memref.load %arg2[%c26] : memref<50xf32, #tpu.memory_space<smem>>
    %c1_95 = arith.constant 1 : index
    %c0_96 = arith.constant 0 : index
    %c1_97 = arith.constant 1 : index
    %172 = vector.load %arg4[%c1_95, %c0_96, %c1_97] : memref<2x20x20xf32, #tpu.memory_space<vmem>>, vector<1x16x16xf32>
    %173 = vector.shape_cast %172 : vector<1x16x16xf32> to vector<16x16xf32>
    %174 = vector.broadcast %171 : f32 to vector<16x16xf32>
    %175 = arith.mulf %174, %173 : vector<16x16xf32>
    %176 = arith.addf %170, %175 : vector<16x16xf32>
    %c27 = arith.constant 27 : index
    %177 = memref.load %arg2[%c27] : memref<50xf32, #tpu.memory_space<smem>>
    %c1_98 = arith.constant 1 : index
    %c0_99 = arith.constant 0 : index
    %c2_100 = arith.constant 2 : index
    %178 = vector.load %arg4[%c1_98, %c0_99, %c2_100] : memref<2x20x20xf32, #tpu.memory_space<vmem>>, vector<1x16x16xf32>
    %179 = vector.shape_cast %178 : vector<1x16x16xf32> to vector<16x16xf32>
    %180 = vector.broadcast %177 : f32 to vector<16x16xf32>
    %181 = arith.mulf %180, %179 : vector<16x16xf32>
    %182 = arith.addf %176, %181 : vector<16x16xf32>
    %c28 = arith.constant 28 : index
    %183 = memref.load %arg2[%c28] : memref<50xf32, #tpu.memory_space<smem>>
    %c1_101 = arith.constant 1 : index
    %c0_102 = arith.constant 0 : index
    %c3_103 = arith.constant 3 : index
    %184 = vector.load %arg4[%c1_101, %c0_102, %c3_103] : memref<2x20x20xf32, #tpu.memory_space<vmem>>, vector<1x16x16xf32>
    %185 = vector.shape_cast %184 : vector<1x16x16xf32> to vector<16x16xf32>
    %186 = vector.broadcast %183 : f32 to vector<16x16xf32>
    %187 = arith.mulf %186, %185 : vector<16x16xf32>
    %188 = arith.addf %182, %187 : vector<16x16xf32>
    %c29 = arith.constant 29 : index
    %189 = memref.load %arg2[%c29] : memref<50xf32, #tpu.memory_space<smem>>
    %c1_104 = arith.constant 1 : index
    %c0_105 = arith.constant 0 : index
    %c4_106 = arith.constant 4 : index
    %190 = vector.load %arg4[%c1_104, %c0_105, %c4_106] : memref<2x20x20xf32, #tpu.memory_space<vmem>>, vector<1x16x16xf32>
    %191 = vector.shape_cast %190 : vector<1x16x16xf32> to vector<16x16xf32>
    %192 = vector.broadcast %189 : f32 to vector<16x16xf32>
    %193 = arith.mulf %192, %191 : vector<16x16xf32>
    %194 = arith.addf %188, %193 : vector<16x16xf32>
    %c30 = arith.constant 30 : index
    %195 = memref.load %arg2[%c30] : memref<50xf32, #tpu.memory_space<smem>>
    %c1_107 = arith.constant 1 : index
    %c1_108 = arith.constant 1 : index
    %c0_109 = arith.constant 0 : index
    %196 = vector.load %arg4[%c1_107, %c1_108, %c0_109] : memref<2x20x20xf32, #tpu.memory_space<vmem>>, vector<1x16x16xf32>
    %197 = vector.shape_cast %196 : vector<1x16x16xf32> to vector<16x16xf32>
    %198 = vector.broadcast %195 : f32 to vector<16x16xf32>
    %199 = arith.mulf %198, %197 : vector<16x16xf32>
    %200 = arith.addf %194, %199 : vector<16x16xf32>
    %c31 = arith.constant 31 : index
    %201 = memref.load %arg2[%c31] : memref<50xf32, #tpu.memory_space<smem>>
    %c1_110 = arith.constant 1 : index
    %c1_111 = arith.constant 1 : index
    %c1_112 = arith.constant 1 : index
    %202 = vector.load %arg4[%c1_110, %c1_111, %c1_112] : memref<2x20x20xf32, #tpu.memory_space<vmem>>, vector<1x16x16xf32>
    %203 = vector.shape_cast %202 : vector<1x16x16xf32> to vector<16x16xf32>
    %204 = vector.broadcast %201 : f32 to vector<16x16xf32>
    %205 = arith.mulf %204, %203 : vector<16x16xf32>
    %206 = arith.addf %200, %205 : vector<16x16xf32>
    %c32 = arith.constant 32 : index
    %207 = memref.load %arg2[%c32] : memref<50xf32, #tpu.memory_space<smem>>
    %c1_113 = arith.constant 1 : index
    %c1_114 = arith.constant 1 : index
    %c2_115 = arith.constant 2 : index
    %208 = vector.load %arg4[%c1_113, %c1_114, %c2_115] : memref<2x20x20xf32, #tpu.memory_space<vmem>>, vector<1x16x16xf32>
    %209 = vector.shape_cast %208 : vector<1x16x16xf32> to vector<16x16xf32>
    %210 = vector.broadcast %207 : f32 to vector<16x16xf32>
    %211 = arith.mulf %210, %209 : vector<16x16xf32>
    %212 = arith.addf %206, %211 : vector<16x16xf32>
    %c33 = arith.constant 33 : index
    %213 = memref.load %arg2[%c33] : memref<50xf32, #tpu.memory_space<smem>>
    %c1_116 = arith.constant 1 : index
    %c1_117 = arith.constant 1 : index
    %c3_118 = arith.constant 3 : index
    %214 = vector.load %arg4[%c1_116, %c1_117, %c3_118] : memref<2x20x20xf32, #tpu.memory_space<vmem>>, vector<1x16x16xf32>
    %215 = vector.shape_cast %214 : vector<1x16x16xf32> to vector<16x16xf32>
    %216 = vector.broadcast %213 : f32 to vector<16x16xf32>
    %217 = arith.mulf %216, %215 : vector<16x16xf32>
    %218 = arith.addf %212, %217 : vector<16x16xf32>
    %c34 = arith.constant 34 : index
    %219 = memref.load %arg2[%c34] : memref<50xf32, #tpu.memory_space<smem>>
    %c1_119 = arith.constant 1 : index
    %c1_120 = arith.constant 1 : index
    %c4_121 = arith.constant 4 : index
    %220 = vector.load %arg4[%c1_119, %c1_120, %c4_121] : memref<2x20x20xf32, #tpu.memory_space<vmem>>, vector<1x16x16xf32>
    %221 = vector.shape_cast %220 : vector<1x16x16xf32> to vector<16x16xf32>
    %222 = vector.broadcast %219 : f32 to vector<16x16xf32>
    %223 = arith.mulf %222, %221 : vector<16x16xf32>
    %224 = arith.addf %218, %223 : vector<16x16xf32>
    %c35 = arith.constant 35 : index
    %225 = memref.load %arg2[%c35] : memref<50xf32, #tpu.memory_space<smem>>
    %c1_122 = arith.constant 1 : index
    %c2_123 = arith.constant 2 : index
    %c0_124 = arith.constant 0 : index
    %226 = vector.load %arg4[%c1_122, %c2_123, %c0_124] : memref<2x20x20xf32, #tpu.memory_space<vmem>>, vector<1x16x16xf32>
    %227 = vector.shape_cast %226 : vector<1x16x16xf32> to vector<16x16xf32>
    %228 = vector.broadcast %225 : f32 to vector<16x16xf32>
    %229 = arith.mulf %228, %227 : vector<16x16xf32>
    %230 = arith.addf %224, %229 : vector<16x16xf32>
    %c36 = arith.constant 36 : index
    %231 = memref.load %arg2[%c36] : memref<50xf32, #tpu.memory_space<smem>>
    %c1_125 = arith.constant 1 : index
    %c2_126 = arith.constant 2 : index
    %c1_127 = arith.constant 1 : index
    %232 = vector.load %arg4[%c1_125, %c2_126, %c1_127] : memref<2x20x20xf32, #tpu.memory_space<vmem>>, vector<1x16x16xf32>
    %233 = vector.shape_cast %232 : vector<1x16x16xf32> to vector<16x16xf32>
    %234 = vector.broadcast %231 : f32 to vector<16x16xf32>
    %235 = arith.mulf %234, %233 : vector<16x16xf32>
    %236 = arith.addf %230, %235 : vector<16x16xf32>
    %c37 = arith.constant 37 : index
    %237 = memref.load %arg2[%c37] : memref<50xf32, #tpu.memory_space<smem>>
    %c1_128 = arith.constant 1 : index
    %c2_129 = arith.constant 2 : index
    %c2_130 = arith.constant 2 : index
    %238 = vector.load %arg4[%c1_128, %c2_129, %c2_130] : memref<2x20x20xf32, #tpu.memory_space<vmem>>, vector<1x16x16xf32>
    %239 = vector.shape_cast %238 : vector<1x16x16xf32> to vector<16x16xf32>
    %240 = vector.broadcast %237 : f32 to vector<16x16xf32>
    %241 = arith.mulf %240, %239 : vector<16x16xf32>
    %242 = arith.addf %236, %241 : vector<16x16xf32>
    %c38 = arith.constant 38 : index
    %243 = memref.load %arg2[%c38] : memref<50xf32, #tpu.memory_space<smem>>
    %c1_131 = arith.constant 1 : index
    %c2_132 = arith.constant 2 : index
    %c3_133 = arith.constant 3 : index
    %244 = vector.load %arg4[%c1_131, %c2_132, %c3_133] : memref<2x20x20xf32, #tpu.memory_space<vmem>>, vector<1x16x16xf32>
    %245 = vector.shape_cast %244 : vector<1x16x16xf32> to vector<16x16xf32>
    %246 = vector.broadcast %243 : f32 to vector<16x16xf32>
    %247 = arith.mulf %246, %245 : vector<16x16xf32>
    %248 = arith.addf %242, %247 : vector<16x16xf32>
    %c39 = arith.constant 39 : index
    %249 = memref.load %arg2[%c39] : memref<50xf32, #tpu.memory_space<smem>>
    %c1_134 = arith.constant 1 : index
    %c2_135 = arith.constant 2 : index
    %c4_136 = arith.constant 4 : index
    %250 = vector.load %arg4[%c1_134, %c2_135, %c4_136] : memref<2x20x20xf32, #tpu.memory_space<vmem>>, vector<1x16x16xf32>
    %251 = vector.shape_cast %250 : vector<1x16x16xf32> to vector<16x16xf32>
    %252 = vector.broadcast %249 : f32 to vector<16x16xf32>
    %253 = arith.mulf %252, %251 : vector<16x16xf32>
    %254 = arith.addf %248, %253 : vector<16x16xf32>
    %c40 = arith.constant 40 : index
    %255 = memref.load %arg2[%c40] : memref<50xf32, #tpu.memory_space<smem>>
    %c1_137 = arith.constant 1 : index
    %c3_138 = arith.constant 3 : index
    %c0_139 = arith.constant 0 : index
    %256 = vector.load %arg4[%c1_137, %c3_138, %c0_139] : memref<2x20x20xf32, #tpu.memory_space<vmem>>, vector<1x16x16xf32>
    %257 = vector.shape_cast %256 : vector<1x16x16xf32> to vector<16x16xf32>
    %258 = vector.broadcast %255 : f32 to vector<16x16xf32>
    %259 = arith.mulf %258, %257 : vector<16x16xf32>
    %260 = arith.addf %254, %259 : vector<16x16xf32>
    %c41 = arith.constant 41 : index
    %261 = memref.load %arg2[%c41] : memref<50xf32, #tpu.memory_space<smem>>
    %c1_140 = arith.constant 1 : index
    %c3_141 = arith.constant 3 : index
    %c1_142 = arith.constant 1 : index
    %262 = vector.load %arg4[%c1_140, %c3_141, %c1_142] : memref<2x20x20xf32, #tpu.memory_space<vmem>>, vector<1x16x16xf32>
    %263 = vector.shape_cast %262 : vector<1x16x16xf32> to vector<16x16xf32>
    %264 = vector.broadcast %261 : f32 to vector<16x16xf32>
    %265 = arith.mulf %264, %263 : vector<16x16xf32>
    %266 = arith.addf %260, %265 : vector<16x16xf32>
    %c42 = arith.constant 42 : index
    %267 = memref.load %arg2[%c42] : memref<50xf32, #tpu.memory_space<smem>>
    %c1_143 = arith.constant 1 : index
    %c3_144 = arith.constant 3 : index
    %c2_145 = arith.constant 2 : index
    %268 = vector.load %arg4[%c1_143, %c3_144, %c2_145] : memref<2x20x20xf32, #tpu.memory_space<vmem>>, vector<1x16x16xf32>
    %269 = vector.shape_cast %268 : vector<1x16x16xf32> to vector<16x16xf32>
    %270 = vector.broadcast %267 : f32 to vector<16x16xf32>
    %271 = arith.mulf %270, %269 : vector<16x16xf32>
    %272 = arith.addf %266, %271 : vector<16x16xf32>
    %c43 = arith.constant 43 : index
    %273 = memref.load %arg2[%c43] : memref<50xf32, #tpu.memory_space<smem>>
    %c1_146 = arith.constant 1 : index
    %c3_147 = arith.constant 3 : index
    %c3_148 = arith.constant 3 : index
    %274 = vector.load %arg4[%c1_146, %c3_147, %c3_148] : memref<2x20x20xf32, #tpu.memory_space<vmem>>, vector<1x16x16xf32>
    %275 = vector.shape_cast %274 : vector<1x16x16xf32> to vector<16x16xf32>
    %276 = vector.broadcast %273 : f32 to vector<16x16xf32>
    %277 = arith.mulf %276, %275 : vector<16x16xf32>
    %278 = arith.addf %272, %277 : vector<16x16xf32>
    %c44 = arith.constant 44 : index
    %279 = memref.load %arg2[%c44] : memref<50xf32, #tpu.memory_space<smem>>
    %c1_149 = arith.constant 1 : index
    %c3_150 = arith.constant 3 : index
    %c4_151 = arith.constant 4 : index
    %280 = vector.load %arg4[%c1_149, %c3_150, %c4_151] : memref<2x20x20xf32, #tpu.memory_space<vmem>>, vector<1x16x16xf32>
    %281 = vector.shape_cast %280 : vector<1x16x16xf32> to vector<16x16xf32>
    %282 = vector.broadcast %279 : f32 to vector<16x16xf32>
    %283 = arith.mulf %282, %281 : vector<16x16xf32>
    %284 = arith.addf %278, %283 : vector<16x16xf32>
    %c45 = arith.constant 45 : index
    %285 = memref.load %arg2[%c45] : memref<50xf32, #tpu.memory_space<smem>>
    %c1_152 = arith.constant 1 : index
    %c4_153 = arith.constant 4 : index
    %c0_154 = arith.constant 0 : index
    %286 = vector.load %arg4[%c1_152, %c4_153, %c0_154] : memref<2x20x20xf32, #tpu.memory_space<vmem>>, vector<1x16x16xf32>
    %287 = vector.shape_cast %286 : vector<1x16x16xf32> to vector<16x16xf32>
    %288 = vector.broadcast %285 : f32 to vector<16x16xf32>
    %289 = arith.mulf %288, %287 : vector<16x16xf32>
    %290 = arith.addf %284, %289 : vector<16x16xf32>
    %c46 = arith.constant 46 : index
    %291 = memref.load %arg2[%c46] : memref<50xf32, #tpu.memory_space<smem>>
    %c1_155 = arith.constant 1 : index
    %c4_156 = arith.constant 4 : index
    %c1_157 = arith.constant 1 : index
    %292 = vector.load %arg4[%c1_155, %c4_156, %c1_157] : memref<2x20x20xf32, #tpu.memory_space<vmem>>, vector<1x16x16xf32>
    %293 = vector.shape_cast %292 : vector<1x16x16xf32> to vector<16x16xf32>
    %294 = vector.broadcast %291 : f32 to vector<16x16xf32>
    %295 = arith.mulf %294, %293 : vector<16x16xf32>
    %296 = arith.addf %290, %295 : vector<16x16xf32>
    %c47 = arith.constant 47 : index
    %297 = memref.load %arg2[%c47] : memref<50xf32, #tpu.memory_space<smem>>
    %c1_158 = arith.constant 1 : index
    %c4_159 = arith.constant 4 : index
    %c2_160 = arith.constant 2 : index
    %298 = vector.load %arg4[%c1_158, %c4_159, %c2_160] : memref<2x20x20xf32, #tpu.memory_space<vmem>>, vector<1x16x16xf32>
    %299 = vector.shape_cast %298 : vector<1x16x16xf32> to vector<16x16xf32>
    %300 = vector.broadcast %297 : f32 to vector<16x16xf32>
    %301 = arith.mulf %300, %299 : vector<16x16xf32>
    %302 = arith.addf %296, %301 : vector<16x16xf32>
    %c48 = arith.constant 48 : index
    %303 = memref.load %arg2[%c48] : memref<50xf32, #tpu.memory_space<smem>>
    %c1_161 = arith.constant 1 : index
    %c4_162 = arith.constant 4 : index
    %c3_163 = arith.constant 3 : index
    %304 = vector.load %arg4[%c1_161, %c4_162, %c3_163] : memref<2x20x20xf32, #tpu.memory_space<vmem>>, vector<1x16x16xf32>
    %305 = vector.shape_cast %304 : vector<1x16x16xf32> to vector<16x16xf32>
    %306 = vector.broadcast %303 : f32 to vector<16x16xf32>
    %307 = arith.mulf %306, %305 : vector<16x16xf32>
    %308 = arith.addf %302, %307 : vector<16x16xf32>
    %c49 = arith.constant 49 : index
    %309 = memref.load %arg2[%c49] : memref<50xf32, #tpu.memory_space<smem>>
    %c1_164 = arith.constant 1 : index
    %c4_165 = arith.constant 4 : index
    %c4_166 = arith.constant 4 : index
    %310 = vector.load %arg4[%c1_164, %c4_165, %c4_166] : memref<2x20x20xf32, #tpu.memory_space<vmem>>, vector<1x16x16xf32>
    %311 = vector.shape_cast %310 : vector<1x16x16xf32> to vector<16x16xf32>
    %312 = vector.broadcast %309 : f32 to vector<16x16xf32>
    %313 = arith.mulf %312, %311 : vector<16x16xf32>
    %314 = arith.addf %308, %313 : vector<16x16xf32>
    %cst_167 = arith.constant 0.000000e+00 : f32
    %315 = vector.broadcast %cst_167 : f32 to vector<16x16xf32>
    %316 = arith.subf %315, %314 : vector<16x16xf32>
    %317 = math.exp %316 : vector<16x16xf32>
    %cst_168 = arith.constant 1.000000e+00 : f32
    %318 = vector.broadcast %cst_168 : f32 to vector<16x16xf32>
    %319 = arith.addf %318, %317 : vector<16x16xf32>
    %cst_169 = arith.constant 1.000000e+00 : f32
    %320 = vector.broadcast %cst_169 : f32 to vector<16x16xf32>
    %321 = arith.divf %320, %319 : vector<16x16xf32>
    %322 = vector.shape_cast %321 : vector<16x16xf32> to vector<1x16x16xf32>
    %323 = vector.broadcast %322 : vector<1x16x16xf32> to vector<4x16x16xf32>
    %324 = arith.mulf %1, %323 : vector<4x16x16xf32>
    %c0_170 = arith.constant 0 : index
    %c0_171 = arith.constant 0 : index
    %c0_172 = arith.constant 0 : index
    %c0_173 = arith.constant 0 : index
    %325 = vector.load %arg3[%c0_170, %c0_171, %c0_172, %c0_173] : memref<1x4x16x16xf32, #tpu.memory_space<vmem>>, vector<1x4x16x16xf32>
    %326 = vector.shape_cast %325 : vector<1x4x16x16xf32> to vector<4x16x16xf32>
    %327 = vector.shape_cast %324 : vector<4x16x16xf32> to vector<1x4x16x16xf32>
    tpu.vector_store %arg3[%c0_170, %c0_171, %c0_172, %c0_173], %327 {strides = array<i32>} : memref<1x4x16x16xf32, #tpu.memory_space<vmem>>, vector<1x4x16x16xf32>,
    return
  }
  func.func @transform_0(%arg0: i32) -> (i32, i32, i32, i32) {
    %c0_i32 = arith.constant 0 : i32
    %c0_i32_0 = arith.constant 0 : i32
    %c0_i32_1 = arith.constant 0 : i32
    %c0_i32_2 = arith.constant 0 : i32
    return %arg0, %c0_i32, %c0_i32_0, %c0_i32_1 : i32, i32, i32, i32
  }
  func.func @transform_1(%arg0: i32) -> i32 {
    %c0_i32 = arith.constant 0 : i32
    %c0_i32_0 = arith.constant 0 : i32
    return %c0_i32 : i32
  }
  func.func @transform_2(%arg0: i32) -> (i32, i32, i32, i32) {
    %c0_i32 = arith.constant 0 : i32
    %c0_i32_0 = arith.constant 0 : i32
    %c0_i32_1 = arith.constant 0 : i32
    %c0_i32_2 = arith.constant 0 : i32
    return %arg0, %c0_i32, %c0_i32_0, %c0_i32_1 : i32, i32, i32, i32
  }
}

</mosaic_0001>

<llo_original>
// kernel: tpu_custom_call.1
$region0: #{tpu_custom_call.1}
  #allocation0 [shape = 'u32[]', space=smem, size = 0x4, offset = 0x4, fixed_abs, tag = 'smem constant byte address 0x4 - core index']
  #allocation1 [shape = 'u32[72,128]{1,0:T(1,128)}', space=vmem, size = 0x9000, scoped, tag = 'internal scratch']
  #allocation2 [shape = 'f32[2,20,20]{2,1,0:T(8,128)}', space=vmem, size = 0x6000, scoped, tag = 'scratch operand']
  %s0 = inlined_call_operand.hbm [shape: f32[2,4,16,16], index: 0, kind: input, shape index: {}]
  %s1 = inlined_call_operand.hbm [shape: f32[50], index: 1, kind: input, shape index: {}]
  %s2 = inlined_call_operand.hbm [shape: f32[2,4,16,16], index: 2, kind: output, shape index: {}]
  %s3 = sld [smem:[#allocation0]]
  $region49: #{tpu_custom_call.1} parent=0
    _
  %s5 = ssub.s32 1, %s3
  %s6 = scalar_select 0, %s5, %s3
  $region1: #{tpu_custom_call.1} parent=0
    #allocation3 [shape = 'u8[65536]{0}', space=vmem, size = 0x10000, scoped, tag = 'input window, operand 0']
    #allocation4 [shape = 's32[2]{0}', space=sflag, size = 0x8, scoped, tag = 'scoped memory for tpu_custom_call.1']
    #allocation5 [shape = 's32[2]{0}', space=sflag, size = 0x8, scoped, tag = 'scoped memory for tpu_custom_call.1']
    #allocation6 [shape = 's32[2]{0}', space=sflag, size = 0x8, scoped, tag = 'scoped memory for tpu_custom_call.1']
    #allocation7 [shape = 'u8[512]{0}', space=smem, size = 0x200, scoped, tag = 'input window, operand 1, single buffered']
    #allocation8 [shape = 'u8[65536]{0}', space=vmem, size = 0x10000, scoped, tag = 'output window, operand 0']
    %7 = vsyncpa [#allocation4], 0
    %s8 = scalar_lea.sflag [#allocation4], 1
    %9 = vsyncpa %s8, 0
    %10 = vsyncpa [#allocation6], 0
    %11 = vsyncpa [#allocation5], 0
    %s12 = scalar_lea.sflag [#allocation5], 1
    %13 = vsyncpa %s12, 0
    loop: start=0, step=1, limit=4
    $region2: #{tpu_custom_call.1} parent=1 // loop_pre_header
      _
    $region3: #{tpu_custom_call.1} parent=1 // loop_header
      %s15 = sphi 0, %s19
      %p16 = scmp.ge.s32.totalorder %s15, 4
      %s25 = sphi 0, %s27
      %s28 = sphi 0, %s25
      %s29 = sphi 0, %s28
      %s45 = sphi 0, %s29
      %s49 = sphi 0, %s49
      %s51 = sphi 0, %s49
      %s52 = sphi 0, %s51
      %s66 = sphi 0, %s52
      %s72 = sphi 0, %s74
      %s75 = sphi 0, %s72
      %s76 = sphi 0, %s75
      %s92 = sphi 0, %s76
    $region4: #{tpu_custom_call.1} parent=1 // loop_header_branch
      %18 = sbr.rel (%p16) target = $region8
    $region5: #{tpu_custom_call.1} parent=1 // loop_body
      %s20 = ssub.s32 %s15, 1
      %s21 = ssub.s32 %s15, 2
      %s22 = sadd.s32 %s15, 1
      %s23 = ssub.s32 %s15, %s22
      %p24 = scmp.eq.s32.totalorder %s23, 0
      %s26 = sadd.s32 %s25, 1
      %s27 = scalar_select %p24, %s25, %s26
      %p30 = pneg %p24
      %p31 = scmp.eq.s32.totalorder %s15, 1
      %p32 = por %p30, %p31
      %p33 = scmp.ne.s32.totalorder %s25, %s28
      %p34 = scmp.eq.s32.totalorder %s15, 0
      %p35 = por %p33, %p34
      %p36 = scmp.ne.s32.totalorder %s25, %s28
      %p37 = scmp.eq.s32.totalorder %s20, 1
      %p38 = por %p36, %p37
      %p39 = scmp.ne.s32.totalorder %s28, %s29
      %p40 = scmp.eq.s32.totalorder %s20, 0
      %p41 = por %p39, %p40
      %p42 = scmp.ne.s32.totalorder %s28, %s29
      %p43 = scmp.eq.s32.totalorder %s21, 1
      %p44 = por %p42, %p43
      %p46 = scmp.ne.s32.totalorder %s29, %s45
      %p47 = scmp.eq.s32.totalorder %s21, 0
      %p48 = por %p46, %p47
      %s50 = sadd.s32 %s49, 1
      %p53 = scmp.eq.s32.totalorder %s15, 1
      %p54 = scmp.ne.s32.totalorder %s49, %s51
      %p55 = scmp.eq.s32.totalorder %s15, 0
      %p56 = por %p54, %p55
      %p57 = scmp.ne.s32.totalorder %s49, %s51
      %p58 = scmp.eq.s32.totalorder %s20, 1
      %p59 = por %p57, %p58
      %p60 = scmp.ne.s32.totalorder %s51, %s52
      %p61 = scmp.eq.s32.totalorder %s20, 0
      %p62 = por %p60, %p61
      %p63 = scmp.ne.s32.totalorder %s51, %s52
      %p64 = scmp.eq.s32.totalorder %s21, 1
      %p65 = por %p63, %p64
      %p67 = scmp.ne.s32.totalorder %s52, %s66
      %p68 = scmp.eq.s32.totalorder %s21, 0
      %p69 = por %p67, %p68
      %s70 = ssub.s32 %s15, %s22
      %p71 = scmp.eq.s32.totalorder %s70, 0
      %s73 = sadd.s32 %s72, 1
      %s74 = scalar_select %p71, %s72, %s73
      %p77 = pneg %p71
      %p78 = scmp.eq.s32.totalorder %s15, 1
      %p79 = por %p77, %p78
      %p80 = scmp.ne.s32.totalorder %s72, %s75
      %p81 = scmp.eq.s32.totalorder %s15, 0
      %p82 = por %p80, %p81
      %p83 = scmp.ne.s32.totalorder %s72, %s75
      %p84 = scmp.eq.s32.totalorder %s20, 1
      %p85 = por %p83, %p84
      %p86 = scmp.ne.s32.totalorder %s75, %s76
      %p87 = scmp.eq.s32.totalorder %s20, 0
      %p88 = por %p86, %p87
      %p89 = scmp.ne.s32.totalorder %s75, %s76
      %p90 = scmp.eq.s32.totalorder %s21, 1
      %p91 = por %p89, %p90
      %p93 = scmp.ne.s32.totalorder %s76, %s92
      %p94 = scmp.eq.s32.totalorder %s21, 0
      %p95 = por %p93, %p94
      %p96 = scmp.le.s32.totalorder 1, %s15
      %p97 = scmp.lt.s32.totalorder %s15, 3
      %p98 = pnand %p96, %p97
      %p99 = pneg %p98
      // Predicated region
      $region9: #{tpu_custom_call.1} parent=5 // pred_check
        _
      $region10: #{tpu_custom_call.1} parent=5 // pred_check_branch
        %101 = sbr.rel (%p98) target = $region12
      $region11: #{tpu_custom_call.1} parent=5 // pred_region
        %s102 = ssub.s32 %s15, 1
        // Predicated region
        $region13: #{tpu_custom_call.1} parent=11 // pred_check
          %p103 = pneg %p62
        $region14: #{tpu_custom_call.1} parent=11 // pred_check_branch
          %105 = sbr.rel (%p103) target = $region16
        $region15: #{tpu_custom_call.1} parent=11 // pred_region
          %107 = vsyncadd [#allocation6], 0
          %s109 = sshll.u32 %s1, 4
          %s110 = int_to_ptr.hbm [resolvable:$true] %s109
          %112 = dma.hbm_to_smem %s110, 16, [#allocation7], [#allocation6]
        $region16: #{tpu_custom_call.1} parent=11 // pred_fallthru
          _
      $region12: #{tpu_custom_call.1} parent=5 // pred_fallthru
        _
      %p113 = scmp.lt.s32.totalorder %s15, 2
      // Predicated region
      $region17: #{tpu_custom_call.1} parent=5 // pred_check
        %p114 = pneg %p113
      $region18: #{tpu_custom_call.1} parent=5 // pred_check_branch
        %116 = sbr.rel (%p114) target = $region20
      $region19: #{tpu_custom_call.1} parent=5 // pred_region
        // Predicated region
        $region21: #{tpu_custom_call.1} parent=19 // pred_check
          %p117 = pneg %p35
        $region22: #{tpu_custom_call.1} parent=19 // pred_check_branch
          %119 = sbr.rel (%p117) target = $region24
        $region23: #{tpu_custom_call.1} parent=19 // pred_region
          %s120 = sand.u32 %s25, 1
          %s121 = scalar_lea.sflag [#allocation4], %s120
          %s122 = sand.u32 %s25, 1
          %s123 = smul.addr %s122, 64
          %s124 = scalar_lea.vmem [#allocation3], %s123
          %126 = vsyncadd %s121, 0
          %s127 = smul.addr %s15, 8
          %s128 = smul.addr %s127, 8
          %s129 = scalar_lea.hbm %s0, %s128
          %s130 = sshll.u32 %s129, 4
          %s131 = int_to_ptr.hbm [resolvable:$true] %s130
          %s132 = sshll.u32 %s124, 4
          %s133 = int_to_ptr.vmem [resolvable:$true] %s132
          %138 = dma.hbm_to_vmem [thread:$0]  %s131, 1024, %s133, %s121, 128, 128, 8
        $region24: #{tpu_custom_call.1} parent=19 // pred_fallthru
          _
      $region20: #{tpu_custom_call.1} parent=5 // pred_fallthru
        _
      %p139 = scmp.le.s32.totalorder 1, %s15
      %p140 = scmp.lt.s32.totalorder %s15, 3
      %p141 = pnand %p139, %p140
      %p142 = pneg %p141
      // Predicated region
      $region25: #{tpu_custom_call.1} parent=5 // pred_check
        _
      $region26: #{tpu_custom_call.1} parent=5 // pred_check_branch
        %144 = sbr.rel (%p141) target = $region28
      $region27: #{tpu_custom_call.1} parent=5 // pred_region
        %s145 = ssub.s32 %s15, 1
        %s146 = sand.u32 %s28, 1
        %s147 = scalar_lea.sflag [#allocation4], %s146
        %s148 = sand.u32 %s28, 1
        %s149 = smul.addr %s148, 64
        %s150 = scalar_lea.vmem [#allocation3], %s149
        // Predicated region
        $region29: #{tpu_custom_call.1} parent=27 // pred_check
          %p151 = pneg %p41
        $region30: #{tpu_custom_call.1} parent=27 // pred_check_branch
          %153 = sbr.rel (%p151) target = $region32
        $region31: #{tpu_custom_call.1} parent=27 // pred_region
          %155 = dma.done %s147, 1024
        $region32: #{tpu_custom_call.1} parent=27 // pred_fallthru
          _
        // Predicated region
        $region33: #{tpu_custom_call.1} parent=27 // pred_check
          %p156 = pneg %p62
        $region34: #{tpu_custom_call.1} parent=27 // pred_check_branch
          %158 = sbr.rel (%p156) target = $region36
        $region35: #{tpu_custom_call.1} parent=27 // pred_region
          %160 = dma.done [#allocation6], 16
        $region36: #{tpu_custom_call.1} parent=27 // pred_fallthru
          _
        %161 = sfence
        %s162 = sand.u32 %s28, 1
        %s163 = scalar_lea.sflag [#allocation4], %s162
        %s164 = sand.u32 %s28, 1
        %s165 = smul.addr %s164, 64
        %s166 = scalar_lea.vmem [#allocation3], %s165
        %p167 = pneg %p41
        %p168 = pneg %p38
        %p169 = pneg %p62
        %p170 = pneg %p59
        %p171 = pneg %p88
        %p172 = pneg %p85
        %s173 = sand.u32 %s75, 1
        %s174 = scalar_lea.sflag [#allocation5], %s173
        %s175 = sand.u32 %s75, 1
        %s176 = smul.addr %s175, 64
        %s177 = scalar_lea.vmem [#allocation8], %s176
        %v178 = vld [vmem:[%s150] sm:$0xff]
        %v179 = vld [vmem:[%s150 + $0x8] sm:$0xff]
        %v180 = vld [vmem:[%s150 + $0x10] sm:$0xff]
        %v181 = vld [vmem:[%s150 + $0x18] sm:$0xff]
        %v182 = vld [vmem:[%s150 + $0x20] sm:$0xff]
        %v183 = vld [vmem:[%s150 + $0x28] sm:$0xff]
        %v184 = vld [vmem:[%s150 + $0x30] sm:$0xff]
        %v185 = vld [vmem:[%s150 + $0x38] sm:$0xff]
        %vm186 = vcmask 130048
        %v187 = vsel %vm186, %v178, -inf
        %v188 = vsel %vm186, %v180, -inf
        %v189 = vsel %vm186, %v182, -inf
        %v190 = vmax.f32 %v187, %v189
        %v191 = vsel %vm186, %v184, -inf
        %v192 = vmax.f32 %v188, %v191
        %v193 = vmax.f32 %v190, %v192
        %v194 = vsel %vm186, %v179, -inf
        %v195 = vsel %vm186, %v181, -inf
        %v196 = vsel %vm186, %v183, -inf
        %v197 = vmax.f32 %v194, %v196
        %v198 = vsel %vm186, %v185, -inf
        %v199 = vmax.f32 %v195, %v198
        %v200 = vmax.f32 %v197, %v199
        %v201 = vsel %vm186, %v178, 0.0
        %v202 = vsel %vm186, %v180, 0.0
        %v203 = vadd.f32 %v201, %v202
        %v204 = vsel %vm186, %v182, 0.0
        %v205 = vadd.f32 %v203, %v204
        %v206 = vsel %vm186, %v184, 0.0
        %v207 = vadd.f32 %v205, %v206
        %v208 = vsel %vm186, %v179, 0.0
        %v209 = vsel %vm186, %v181, 0.0
        %v210 = vadd.f32 %v208, %v209
        %v211 = vsel %vm186, %v183, 0.0
        %v212 = vadd.f32 %v210, %v211
        %v213 = vsel %vm186, %v185, 0.0
        %v214 = vadd.f32 %v212, %v213
        %v215 = vmul.f32 %v207, 0.25
        %v216 = vmul.f32 %v214, 0.25
        %vm217 = vcmask 162816
        %218 = vst.msk [vmem:[#allocation2] sm:$0xff] %vm217, 0.0
        %219 = vst.msk [vmem:[#allocation2 + $0x8] sm:$0xff] %vm217, 0.0
        %vm220 = vcmask 158720
        %221 = vst.msk [vmem:[#allocation2 + $0x10] sm:$0xf] %vm220, 0.0
        %222 = vst.msk [vmem:[#allocation2 + $0x18] sm:$0xff] %vm217, 0.0
        %223 = vst.msk [vmem:[#allocation2 + $0x20] sm:$0xff] %vm217, 0.0
        %224 = vst.msk [vmem:[#allocation2 + $0x28] sm:$0xf] %vm220, 0.0
        %227 = vrot.lane.b32.xlu0 %v193, 2
        %v228 = vpop.permute.xlu0 %227
        %229 = vrot.lane.b32.xlu0 %v200, 2
        %v230 = vpop.permute.xlu0 %229
        %vm233 = vcmask 146448
        %234 = vst.msk [vmem:[#allocation2 + $0x2] sm:$0xff] %vm233, %v228
        %235 = vst.msk [vmem:[#allocation2 + $0xa] sm:$0xff] %vm233, %v230
        %238 = vrot.lane.b32.xlu0 %v215, 2
        %v239 = vpop.permute.xlu0 %238
        %240 = vrot.lane.b32.xlu0 %v216, 2
        %v241 = vpop.permute.xlu0 %240
        %s244 = scalar_lea.vmem [#allocation2], 24
        %245 = vst.msk [vmem:[%s244 + $0x2] sm:$0xff] %vm233, %v239
        %246 = vst.msk [vmem:[%s244 + $0xa] sm:$0xff] %vm233, %v241
        %s247 = sld [smem:[#allocation7]]
        %v248 = vld [vmem:[#allocation2] sm:$0xff]
        %v249 = vld [vmem:[#allocation2 + $0x8] sm:$0xff]
        %v250 = vstv %s247
        %v251 = vmul.f32 %v250, %v248
        %v252 = vmul.f32 %v250, %v249
        %v253 = vadd.f32 %v251, 0.0
        %v254 = vadd.f32 %v252, 0.0
        %s255 = sld [smem:[#allocation7 + $0x1]]
        %v256 = vstv %s255
        %v257 = vmul.f32 %v256, %v248
        %v258 = vmul.f32 %v256, %v249
        %261 = vrot.lane.b32.xlu0 %v257, 127
        %v262 = vpop.permute.xlu0 %261
        %263 = vrot.lane.b32.xlu0 %v258, 127
        %v264 = vpop.permute.xlu0 %263
        %v267 = vadd.f32 %v253, %v262
        %v268 = vadd.f32 %v254, %v264
        %s269 = sld [smem:[#allocation7 + $0x2]]
        %v270 = vstv %s269
        %v271 = vmul.f32 %v270, %v248
        %v272 = vmul.f32 %v270, %v249
        %275 = vrot.lane.b32.xlu0 %v271, 126
        %v276 = vpop.permute.xlu0 %275
        %277 = vrot.lane.b32.xlu0 %v272, 126
        %v278 = vpop.permute.xlu0 %277
        %v281 = vadd.f32 %v267, %v276
        %v282 = vadd.f32 %v268, %v278
        %s283 = sld [smem:[#allocation7 + $0x3]]
        %v284 = vstv %s283
        %v285 = vmul.f32 %v284, %v248
        %v286 = vmul.f32 %v284, %v249
        %289 = vrot.lane.b32.xlu0 %v285, 125
        %v290 = vpop.permute.xlu0 %289
        %291 = vrot.lane.b32.xlu0 %v286, 125
        %v292 = vpop.permute.xlu0 %291
        %v295 = vadd.f32 %v281, %v290
        %v296 = vadd.f32 %v282, %v292
        %s297 = sld [smem:[#allocation7 + $0x4]]
        %v298 = vstv %s297
        %v299 = vmul.f32 %v298, %v248
        %v300 = vmul.f32 %v298, %v249
        %303 = vrot.lane.b32.xlu0 %v299, 124
        %v304 = vpop.permute.xlu0 %303
        %305 = vrot.lane.b32.xlu0 %v300, 124
        %v306 = vpop.permute.xlu0 %305
        %v309 = vadd.f32 %v295, %v304
        %v310 = vadd.f32 %v296, %v306
        %s311 = sld [smem:[#allocation7 + $0x5]]
        %v312 = vld [vmem:[#allocation2 + $0x1] sm:$0xff]
        %v313 = vld [vmem:[#allocation2 + $0x9] sm:$0xff]
        %v314 = vstv %s311
        %v315 = vmul.f32 %v314, %v312
        %v316 = vmul.f32 %v314, %v313
        %v317 = vadd.f32 %v309, %v315
        %v318 = vadd.f32 %v310, %v316
        %s319 = sld [smem:[#allocation7 + $0x6]]
        %v320 = vstv %s319
        %v321 = vmul.f32 %v320, %v312
        %v322 = vmul.f32 %v320, %v313
        %325 = vrot.lane.b32.xlu0 %v321, 127
        %v326 = vpop.permute.xlu0 %325
        %327 = vrot.lane.b32.xlu0 %v322, 127
        %v328 = vpop.permute.xlu0 %327
        %v331 = vadd.f32 %v317, %v326
        %v332 = vadd.f32 %v318, %v328
        %s333 = sld [smem:[#allocation7 + $0x7]]
        %v334 = vstv %s333
        %v335 = vmul.f32 %v334, %v312
        %v336 = vmul.f32 %v334, %v313
        %339 = vrot.lane.b32.xlu0 %v335, 126
        %v340 = vpop.permute.xlu0 %339
        %341 = vrot.lane.b32.xlu0 %v336, 126
        %v342 = vpop.permute.xlu0 %341
        %v345 = vadd.f32 %v331, %v340
        %v346 = vadd.f32 %v332, %v342
        %s347 = sld [smem:[#allocation7 + $0x8]]
        %v348 = vstv %s347
        %v349 = vmul.f32 %v348, %v312
        %v350 = vmul.f32 %v348, %v313
        %353 = vrot.lane.b32.xlu0 %v349, 125
        %v354 = vpop.permute.xlu0 %353
        %355 = vrot.lane.b32.xlu0 %v350, 125
        %v356 = vpop.permute.xlu0 %355
        %v359 = vadd.f32 %v345, %v354
        %v360 = vadd.f32 %v346, %v356
        %s361 = sld [smem:[#allocation7 + $0x9]]
        %v362 = vstv %s361
        %v363 = vmul.f32 %v362, %v312
        %v364 = vmul.f32 %v362, %v313
        %367 = vrot.lane.b32.xlu0 %v363, 124
        %v368 = vpop.permute.xlu0 %367
        %369 = vrot.lane.b32.xlu0 %v364, 124
        %v370 = vpop.permute.xlu0 %369
        %v373 = vadd.f32 %v359, %v368
        %v374 = vadd.f32 %v360, %v370
        %s375 = sld [smem:[#allocation7 + $0xa]]
        %v376 = vld [vmem:[#allocation2 + $0x2] sm:$0xff]
        %v377 = vld [vmem:[#allocation2 + $0xa] sm:$0xff]
        %v378 = vstv %s375
        %v379 = vmul.f32 %v378, %v376
        %v380 = vmul.f32 %v378, %v377
        %v381 = vadd.f32 %v373, %v379
        %v382 = vadd.f32 %v374, %v380
        %s383 = sld [smem:[#allocation7 + $0xb]]
        %v384 = vstv %s383
        %v385 = vmul.f32 %v384, %v376
        %v386 = vmul.f32 %v384, %v377
        %389 = vrot.lane.b32.xlu0 %v385, 127
        %v390 = vpop.permute.xlu0 %389
        %391 = vrot.lane.b32.xlu0 %v386, 127
        %v392 = vpop.permute.xlu0 %391
        %v395 = vadd.f32 %v381, %v390
        %v396 = vadd.f32 %v382, %v392
        %s397 = sld [smem:[#allocation7 + $0xc]]
        %v398 = vstv %s397
        %v399 = vmul.f32 %v398, %v376
        %v400 = vmul.f32 %v398, %v377
        %403 = vrot.lane.b32.xlu0 %v399, 126
        %v404 = vpop.permute.xlu0 %403
        %405 = vrot.lane.b32.xlu0 %v400, 126
        %v406 = vpop.permute.xlu0 %405
        %v409 = vadd.f32 %v395, %v404
        %v410 = vadd.f32 %v396, %v406
        %s411 = sld [smem:[#allocation7 + $0xd]]
        %v412 = vstv %s411
        %v413 = vmul.f32 %v412, %v376
        %v414 = vmul.f32 %v412, %v377
        %417 = vrot.lane.b32.xlu0 %v413, 125
        %v418 = vpop.permute.xlu0 %417
        %419 = vrot.lane.b32.xlu0 %v414, 125
        %v420 = vpop.permute.xlu0 %419
        %v423 = vadd.f32 %v409, %v418
        %v424 = vadd.f32 %v410, %v420
        %s425 = sld [smem:[#allocation7 + $0xe]]
        %v426 = vstv %s425
        %v427 = vmul.f32 %v426, %v376
        %v428 = vmul.f32 %v426, %v377
        %431 = vrot.lane.b32.xlu0 %v427, 124
        %v432 = vpop.permute.xlu0 %431
        %433 = vrot.lane.b32.xlu0 %v428, 124
        %v434 = vpop.permute.xlu0 %433
        %v437 = vadd.f32 %v423, %v432
        %v438 = vadd.f32 %v424, %v434
        %s439 = sld [smem:[#allocation7 + $0xf]]
        %v440 = vld [vmem:[#allocation2 + $0x3] sm:$0xff]
        %v441 = vld [vmem:[#allocation2 + $0xb] sm:$0xff]
        %v442 = vstv %s439
        %v443 = vmul.f32 %v442, %v440
        %v444 = vmul.f32 %v442, %v441
        %v445 = vadd.f32 %v437, %v443
        %v446 = vadd.f32 %v438, %v444
        %s447 = sld [smem:[#allocation7 + $0x10]]
        %v448 = vstv %s447
        %v449 = vmul.f32 %v448, %v440
        %v450 = vmul.f32 %v448, %v441
        %453 = vrot.lane.b32.xlu0 %v449, 127
        %v454 = vpop.permute.xlu0 %453
        %455 = vrot.lane.b32.xlu0 %v450, 127
        %v456 = vpop.permute.xlu0 %455
        %v459 = vadd.f32 %v445, %v454
        %v460 = vadd.f32 %v446, %v456
        %s461 = sld [smem:[#allocation7 + $0x11]]
        %v462 = vstv %s461
        %v463 = vmul.f32 %v462, %v440
        %v464 = vmul.f32 %v462, %v441
        %467 = vrot.lane.b32.xlu0 %v463, 126
        %v468 = vpop.permute.xlu0 %467
        %469 = vrot.lane.b32.xlu0 %v464, 126
        %v470 = vpop.permute.xlu0 %469
        %v473 = vadd.f32 %v459, %v468
        %v474 = vadd.f32 %v460, %v470
        %s475 = sld [smem:[#allocation7 + $0x12]]
        %v476 = vstv %s475
        %v477 = vmul.f32 %v476, %v440
        %v478 = vmul.f32 %v476, %v441
        %481 = vrot.lane.b32.xlu0 %v477, 125
        %v482 = vpop.permute.xlu0 %481
        %483 = vrot.lane.b32.xlu0 %v478, 125
        %v484 = vpop.permute.xlu0 %483
        %v487 = vadd.f32 %v473, %v482
        %v488 = vadd.f32 %v474, %v484
        %s489 = sld [smem:[#allocation7 + $0x13]]
        %v490 = vstv %s489
        %v491 = vmul.f32 %v490, %v440
        %v492 = vmul.f32 %v490, %v441
        %495 = vrot.lane.b32.xlu0 %v491, 124
        %v496 = vpop.permute.xlu0 %495
        %497 = vrot.lane.b32.xlu0 %v492, 124
        %v498 = vpop.permute.xlu0 %497
        %v501 = vadd.f32 %v487, %v496
        %v502 = vadd.f32 %v488, %v498
        %s503 = sld [smem:[#allocation7 + $0x14]]
        %v504 = vld [vmem:[#allocation2 + $0x4] sm:$0xff]
        %v505 = vld [vmem:[#allocation2 + $0xc] sm:$0xff]
        %v506 = vstv %s503
        %v507 = vmul.f32 %v506, %v504
        %v508 = vmul.f32 %v506, %v505
        %v509 = vadd.f32 %v501, %v507
        %v510 = vadd.f32 %v502, %v508
        %s511 = sld [smem:[#allocation7 + $0x15]]
        %v512 = vstv %s511
        %v513 = vmul.f32 %v512, %v504
        %v514 = vmul.f32 %v512, %v505
        %517 = vrot.lane.b32.xlu0 %v513, 127
        %v518 = vpop.permute.xlu0 %517
        %519 = vrot.lane.b32.xlu0 %v514, 127
        %v520 = vpop.permute.xlu0 %519
        %v523 = vadd.f32 %v509, %v518
        %v524 = vadd.f32 %v510, %v520
        %s525 = sld [smem:[#allocation7 + $0x16]]
        %v526 = vstv %s525
        %v527 = vmul.f32 %v526, %v504
        %v528 = vmul.f32 %v526, %v505
        %531 = vrot.lane.b32.xlu0 %v527, 126
        %v532 = vpop.permute.xlu0 %531
        %533 = vrot.lane.b32.xlu0 %v528, 126
        %v534 = vpop.permute.xlu0 %533
        %v537 = vadd.f32 %v523, %v532
        %v538 = vadd.f32 %v524, %v534
        %s539 = sld [smem:[#allocation7 + $0x17]]
        %v540 = vstv %s539
        %v541 = vmul.f32 %v540, %v504
        %v542 = vmul.f32 %v540, %v505
        %545 = vrot.lane.b32.xlu0 %v541, 125
        %v546 = vpop.permute.xlu0 %545
        %547 = vrot.lane.b32.xlu0 %v542, 125
        %v548 = vpop.permute.xlu0 %547
        %v551 = vadd.f32 %v537, %v546
        %v552 = vadd.f32 %v538, %v548
        %s553 = sld [smem:[#allocation7 + $0x18]]
        %v554 = vstv %s553
        %v555 = vmul.f32 %v554, %v504
        %v556 = vmul.f32 %v554, %v505
        %559 = vrot.lane.b32.xlu0 %v555, 124
        %v560 = vpop.permute.xlu0 %559
        %561 = vrot.lane.b32.xlu0 %v556, 124
        %v562 = vpop.permute.xlu0 %561
        %v565 = vadd.f32 %v551, %v560
        %v566 = vadd.f32 %v552, %v562
        %s567 = sld [smem:[#allocation7 + $0x19]]
        %v568 = vld [vmem:[%s244] sm:$0xff]
        %v569 = vld [vmem:[%s244 + $0x8] sm:$0xff]
        %v570 = vstv %s567
        %v571 = vmul.f32 %v570, %v568
        %v572 = vmul.f32 %v570, %v569
        %v573 = vadd.f32 %v565, %v571
        %v574 = vadd.f32 %v566, %v572
        %s575 = sld [smem:[#allocation7 + $0x1a]]
        %v576 = vstv %s575
        %v577 = vmul.f32 %v576, %v568
        %v578 = vmul.f32 %v576, %v569
        %581 = vrot.lane.b32.xlu0 %v577, 127
        %v582 = vpop.permute.xlu0 %581
        %583 = vrot.lane.b32.xlu0 %v578, 127
        %v584 = vpop.permute.xlu0 %583
        %v587 = vadd.f32 %v573, %v582
        %v588 = vadd.f32 %v574, %v584
        %s589 = sld [smem:[#allocation7 + $0x1b]]
        %v590 = vstv %s589
        %v591 = vmul.f32 %v590, %v568
        %v592 = vmul.f32 %v590, %v569
        %595 = vrot.lane.b32.xlu0 %v591, 126
        %v596 = vpop.permute.xlu0 %595
        %597 = vrot.lane.b32.xlu0 %v592, 126
        %v598 = vpop.permute.xlu0 %597
        %v601 = vadd.f32 %v587, %v596
        %v602 = vadd.f32 %v588, %v598
        %s603 = sld [smem:[#allocation7 + $0x1c]]
        %v604 = vstv %s603
        %v605 = vmul.f32 %v604, %v568
        %v606 = vmul.f32 %v604, %v569
        %609 = vrot.lane.b32.xlu0 %v605, 125
        %v610 = vpop.permute.xlu0 %609
        %611 = vrot.lane.b32.xlu0 %v606, 125
        %v612 = vpop.permute.xlu0 %611
        %v615 = vadd.f32 %v601, %v610
        %v616 = vadd.f32 %v602, %v612
        %s617 = sld [smem:[#allocation7 + $0x1d]]
        %v618 = vstv %s617
        %v619 = vmul.f32 %v618, %v568
        %v620 = vmul.f32 %v618, %v569
        %623 = vrot.lane.b32.xlu0 %v619, 124
        %v624 = vpop.permute.xlu0 %623
        %625 = vrot.lane.b32.xlu0 %v620, 124
        %v626 = vpop.permute.xlu0 %625
        %v629 = vadd.f32 %v615, %v624
        %v630 = vadd.f32 %v616, %v626
        %s631 = sld [smem:[#allocation7 + $0x1e]]
        %v632 = vld [vmem:[%s244 + $0x1] sm:$0xff]
        %v633 = vld [vmem:[%s244 + $0x9] sm:$0xff]
        %v634 = vstv %s631
        %v635 = vmul.f32 %v634, %v632
        %v636 = vmul.f32 %v634, %v633
        %v637 = vadd.f32 %v629, %v635
        %v638 = vadd.f32 %v630, %v636
        %s639 = sld [smem:[#allocation7 + $0x1f]]
        %v640 = vstv %s639
        %v641 = vmul.f32 %v640, %v632
        %v642 = vmul.f32 %v640, %v633
        %645 = vrot.lane.b32.xlu0 %v641, 127
        %v646 = vpop.permute.xlu0 %645
        %647 = vrot.lane.b32.xlu0 %v642, 127
        %v648 = vpop.permute.xlu0 %647
        %v651 = vadd.f32 %v637, %v646
        %v652 = vadd.f32 %v638, %v648
        %s653 = sld [smem:[#allocation7 + $0x20]]
        %v654 = vstv %s653
        %v655 = vmul.f32 %v654, %v632
        %v656 = vmul.f32 %v654, %v633
        %659 = vrot.lane.b32.xlu0 %v655, 126
        %v660 = vpop.permute.xlu0 %659
        %661 = vrot.lane.b32.xlu0 %v656, 126
        %v662 = vpop.permute.xlu0 %661
        %v665 = vadd.f32 %v651, %v660
        %v666 = vadd.f32 %v652, %v662
        %s667 = sld [smem:[#allocation7 + $0x21]]
        %v668 = vstv %s667
        %v669 = vmul.f32 %v668, %v632
        %v670 = vmul.f32 %v668, %v633
        %673 = vrot.lane.b32.xlu0 %v669, 125
        %v674 = vpop.permute.xlu0 %673
        %675 = vrot.lane.b32.xlu0 %v670, 125
        %v676 = vpop.permute.xlu0 %675
        %v679 = vadd.f32 %v665, %v674
        %v680 = vadd.f32 %v666, %v676
        %s681 = sld [smem:[#allocation7 + $0x22]]
        %v682 = vstv %s681
        %v683 = vmul.f32 %v682, %v632
        %v684 = vmul.f32 %v682, %v633
        %687 = vrot.lane.b32.xlu0 %v683, 124
        %v688 = vpop.permute.xlu0 %687
        %689 = vrot.lane.b32.xlu0 %v684, 124
        %v690 = vpop.permute.xlu0 %689
        %v693 = vadd.f32 %v679, %v688
        %v694 = vadd.f32 %v680, %v690
        %s695 = sld [smem:[#allocation7 + $0x23]]
        %v696 = vld [vmem:[%s244 + $0x2] sm:$0xff]
        %v697 = vld [vmem:[%s244 + $0xa] sm:$0xff]
        %v698 = vstv %s695
        %v699 = vmul.f32 %v698, %v696
        %v700 = vmul.f32 %v698, %v697
        %v701 = vadd.f32 %v693, %v699
        %v702 = vadd.f32 %v694, %v700
        %s703 = sld [smem:[#allocation7 + $0x24]]
        %v704 = vstv %s703
        %v705 = vmul.f32 %v704, %v696
        %v706 = vmul.f32 %v704, %v697
        %709 = vrot.lane.b32.xlu0 %v705, 127
        %v710 = vpop.permute.xlu0 %709
        %711 = vrot.lane.b32.xlu0 %v706, 127
        %v712 = vpop.permute.xlu0 %711
        %v715 = vadd.f32 %v701, %v710
        %v716 = vadd.f32 %v702, %v712
        %s717 = sld [smem:[#allocation7 + $0x25]]
        %v718 = vstv %s717
        %v719 = vmul.f32 %v718, %v696
        %v720 = vmul.f32 %v718, %v697
        %723 = vrot.lane.b32.xlu0 %v719, 126
        %v724 = vpop.permute.xlu0 %723
        %725 = vrot.lane.b32.xlu0 %v720, 126
        %v726 = vpop.permute.xlu0 %725
        %v729 = vadd.f32 %v715, %v724
        %v730 = vadd.f32 %v716, %v726
        %s731 = sld [smem:[#allocation7 + $0x26]]
        %v732 = vstv %s731
        %v733 = vmul.f32 %v732, %v696
        %v734 = vmul.f32 %v732, %v697
        %737 = vrot.lane.b32.xlu0 %v733, 125
        %v738 = vpop.permute.xlu0 %737
        %739 = vrot.lane.b32.xlu0 %v734, 125
        %v740 = vpop.permute.xlu0 %739
        %v743 = vadd.f32 %v729, %v738
        %v744 = vadd.f32 %v730, %v740
        %s745 = sld [smem:[#allocation7 + $0x27]]
        %v746 = vstv %s745
        %v747 = vmul.f32 %v746, %v696
        %v748 = vmul.f32 %v746, %v697
        %751 = vrot.lane.b32.xlu0 %v747, 124
        %v752 = vpop.permute.xlu0 %751
        %753 = vrot.lane.b32.xlu0 %v748, 124
        %v754 = vpop.permute.xlu0 %753
        %v757 = vadd.f32 %v743, %v752
        %v758 = vadd.f32 %v744, %v754
        %s759 = sld [smem:[#allocation7 + $0x28]]
        %v760 = vld [vmem:[%s244 + $0x3] sm:$0xff]
        %v761 = vld [vmem:[%s244 + $0xb] sm:$0xff]
        %v762 = vstv %s759
        %v763 = vmul.f32 %v762, %v760
        %v764 = vmul.f32 %v762, %v761
        %v765 = vadd.f32 %v757, %v763
        %v766 = vadd.f32 %v758, %v764
        %s767 = sld [smem:[#allocation7 + $0x29]]
        %v768 = vstv %s767
        %v769 = vmul.f32 %v768, %v760
        %v770 = vmul.f32 %v768, %v761
        %773 = vrot.lane.b32.xlu0 %v769, 127
        %v774 = vpop.permute.xlu0 %773
        %775 = vrot.lane.b32.xlu0 %v770, 127
        %v776 = vpop.permute.xlu0 %775
        %v779 = vadd.f32 %v765, %v774
        %v780 = vadd.f32 %v766, %v776
        %s781 = sld [smem:[#allocation7 + $0x2a]]
        %v782 = vstv %s781
        %v783 = vmul.f32 %v782, %v760
        %v784 = vmul.f32 %v782, %v761
        %787 = vrot.lane.b32.xlu0 %v783, 126
        %v788 = vpop.permute.xlu0 %787
        %789 = vrot.lane.b32.xlu0 %v784, 126
        %v790 = vpop.permute.xlu0 %789
        %v793 = vadd.f32 %v779, %v788
        %v794 = vadd.f32 %v780, %v790
        %s795 = sld [smem:[#allocation7 + $0x2b]]
        %v796 = vstv %s795
        %v797 = vmul.f32 %v796, %v760
        %v798 = vmul.f32 %v796, %v761
        %801 = vrot.lane.b32.xlu0 %v797, 125
        %v802 = vpop.permute.xlu0 %801
        %803 = vrot.lane.b32.xlu0 %v798, 125
        %v804 = vpop.permute.xlu0 %803
        %v807 = vadd.f32 %v793, %v802
        %v808 = vadd.f32 %v794, %v804
        %s809 = sld [smem:[#allocation7 + $0x2c]]
        %v810 = vstv %s809
        %v811 = vmul.f32 %v810, %v760
        %v812 = vmul.f32 %v810, %v761
        %815 = vrot.lane.b32.xlu0 %v811, 124
        %v816 = vpop.permute.xlu0 %815
        %817 = vrot.lane.b32.xlu0 %v812, 124
        %v818 = vpop.permute.xlu0 %817
        %v821 = vadd.f32 %v807, %v816
        %v822 = vadd.f32 %v808, %v818
        %s823 = sld [smem:[#allocation7 + $0x2d]]
        %v824 = vld [vmem:[%s244 + $0x4] sm:$0xff]
        %v825 = vld [vmem:[%s244 + $0xc] sm:$0xff]
        %v826 = vstv %s823
        %v827 = vmul.f32 %v826, %v824
        %v828 = vmul.f32 %v826, %v825
        %v829 = vadd.f32 %v821, %v827
        %v830 = vadd.f32 %v822, %v828
        %s831 = sld [smem:[#allocation7 + $0x2e]]
        %v832 = vstv %s831
        %v833 = vmul.f32 %v832, %v824
        %v834 = vmul.f32 %v832, %v825
        %837 = vrot.lane.b32.xlu0 %v833, 127
        %v838 = vpop.permute.xlu0 %837
        %839 = vrot.lane.b32.xlu0 %v834, 127
        %v840 = vpop.permute.xlu0 %839
        %v843 = vadd.f32 %v829, %v838
        %v844 = vadd.f32 %v830, %v840
        %s845 = sld [smem:[#allocation7 + $0x2f]]
        %v846 = vstv %s845
        %v847 = vmul.f32 %v846, %v824
        %v848 = vmul.f32 %v846, %v825
        %851 = vrot.lane.b32.xlu0 %v847, 126
        %v852 = vpop.permute.xlu0 %851
        %853 = vrot.lane.b32.xlu0 %v848, 126
        %v854 = vpop.permute.xlu0 %853
        %v857 = vadd.f32 %v843, %v852
        %v858 = vadd.f32 %v844, %v854
        %s859 = sld [smem:[#allocation7 + $0x30]]
        %v860 = vstv %s859
        %v861 = vmul.f32 %v860, %v824
        %v862 = vmul.f32 %v860, %v825
        %865 = vrot.lane.b32.xlu0 %v861, 125
        %v866 = vpop.permute.xlu0 %865
        %867 = vrot.lane.b32.xlu0 %v862, 125
        %v868 = vpop.permute.xlu0 %867
        %v871 = vadd.f32 %v857, %v866
        %v872 = vadd.f32 %v858, %v868
        %s873 = sld [smem:[#allocation7 + $0x31]]
        %v874 = vstv %s873
        %v875 = vmul.f32 %v874, %v824
        %v876 = vmul.f32 %v874, %v825
        %879 = vrot.lane.b32.xlu0 %v875, 124
        %v880 = vpop.permute.xlu0 %879
        %881 = vrot.lane.b32.xlu0 %v876, 124
        %v882 = vpop.permute.xlu0 %881
        %v885 = vadd.f32 %v871, %v880
        %v886 = vadd.f32 %v872, %v882
        %v887 = vsub.f32 0.0, %v885
        %v888 = vsub.f32 0.0, %v886
        %v889 = vmul.f32 %v887, 1.442695
        %v890 = vpow.pop %v889
        %v891 = vmul.f32 %v888, 1.442695
        %v892 = vpow.pop %v891
        %v893 = vadd.f32 %v890, 1.0
        %v894 = vadd.f32 %v892, 1.0
        %v895 = vrcp.pop %v893
        %v896 = vmul.f32 %v893, %v895
        %v897 = vsub.f32 1.0, %v896
        %v898 = vmul.f32 %v895, %v897
        %v899 = vadd.f32 %v895, %v898
        %vm900 = vweird.f32 %v893
        %vm901 = vweird.f32 %v895
        %vm902 = vmor %vm900, %vm901
        %v903 = vsel %vm902, %v895, %v899
        %v904 = vand.u32 2147483647, %v893
        %vm905 = vcmp.eq.f32.partialorder %v904, 8.507059e+37
        %v906 = vand.u32 %v893, 2147483648
        %v907 = vor.u32 1.1754944e-38, %v906
        %v908 = vsel %vm905, %v907, %v903
        %v909 = vmul.f32 1.0, %v908
        %v910 = vrcp.pop %v894
        %v911 = vmul.f32 %v894, %v910
        %v912 = vsub.f32 1.0, %v911
        %v913 = vmul.f32 %v910, %v912
        %v914 = vadd.f32 %v910, %v913
        %vm915 = vweird.f32 %v894
        %vm916 = vweird.f32 %v910
        %vm917 = vmor %vm915, %vm916
        %v918 = vsel %vm917, %v910, %v914
        %v919 = vand.u32 2147483647, %v894
        %vm920 = vcmp.eq.f32.partialorder %v919, 8.507059e+37
        %v921 = vand.u32 %v894, 2147483648
        %v922 = vor.u32 1.1754944e-38, %v921
        %v923 = vsel %vm920, %v922, %v918
        %v924 = vmul.f32 1.0, %v923
        %v925 = vmul.f32 %v178, %v909
        %v926 = vmul.f32 %v179, %v924
        %v927 = vmul.f32 %v180, %v909
        %v928 = vmul.f32 %v181, %v924
        %v929 = vmul.f32 %v182, %v909
        %v930 = vmul.f32 %v183, %v924
        %v931 = vmul.f32 %v184, %v909
        %v932 = vmul.f32 %v185, %v924
        %933 = vst.msk [vmem:[%s177] sm:$0xff] %vm186, %v925
        %934 = vst.msk [vmem:[%s177 + $0x8] sm:$0xff] %vm186, %v926
        %935 = vst.msk [vmem:[%s177 + $0x10] sm:$0xff] %vm186, %v927
        %936 = vst.msk [vmem:[%s177 + $0x18] sm:$0xff] %vm186, %v928
        %937 = vst.msk [vmem:[%s177 + $0x20] sm:$0xff] %vm186, %v929
        %938 = vst.msk [vmem:[%s177 + $0x28] sm:$0xff] %vm186, %v930
        %939 = vst.msk [vmem:[%s177 + $0x30] sm:$0xff] %vm186, %v931
        %940 = vst.msk [vmem:[%s177 + $0x38] sm:$0xff] %vm186, %v932
        %s941 = sand.u32 %s75, 1
        %s942 = scalar_lea.sflag [#allocation5], %s941
        %s943 = sand.u32 %s75, 1
        %s944 = smul.addr %s943, 64
        %s945 = scalar_lea.vmem [#allocation8], %s944
        // Predicated region
        $region37: #{tpu_custom_call.1} parent=27 // pred_check
          %p946 = pneg %p85
        $region38: #{tpu_custom_call.1} parent=27 // pred_check_branch
          %948 = sbr.rel (%p946) target = $region40
        $region39: #{tpu_custom_call.1} parent=27 // pred_region
          %950 = vsyncadd %s942, 0
          %s951 = smul.addr %s20, 8
          %s952 = smul.addr %s951, 8
          %s953 = scalar_lea.hbm %s2, %s952
          %s954 = sshll.u32 %s945, 4
          %s955 = int_to_ptr.vmem [resolvable:$true] %s954
          %s956 = sshll.u32 %s953, 4
          %s957 = int_to_ptr.hbm [resolvable:$true] %s956
          %962 = dma.vmem_to_hbm [thread:$0]  %s955, 1024, %s957, %s942, 128, 128, 8
        $region40: #{tpu_custom_call.1} parent=27 // pred_fallthru
          _
      $region28: #{tpu_custom_call.1} parent=5 // pred_fallthru
        _
      %p963 = scmp.le.s32.totalorder 2, %s15
      // Predicated region
      $region41: #{tpu_custom_call.1} parent=5 // pred_check
        %p964 = pneg %p963
      $region42: #{tpu_custom_call.1} parent=5 // pred_check_branch
        %966 = sbr.rel (%p964) target = $region44
      $region43: #{tpu_custom_call.1} parent=5 // pred_region
        %s967 = ssub.s32 %s15, 2
        // Predicated region
        $region45: #{tpu_custom_call.1} parent=43 // pred_check
          %p968 = pneg %p91
        $region46: #{tpu_custom_call.1} parent=43 // pred_check_branch
          %970 = sbr.rel (%p968) target = $region48
        $region47: #{tpu_custom_call.1} parent=43 // pred_region
          %s971 = sand.u32 %s76, 1
          %s972 = scalar_lea.sflag [#allocation5], %s971
          %s973 = sand.u32 %s76, 1
          %s974 = smul.addr %s973, 64
          %s975 = scalar_lea.vmem [#allocation8], %s974
          %977 = dma.done %s972, 1024
        $region48: #{tpu_custom_call.1} parent=43 // pred_fallthru
          _
      $region44: #{tpu_custom_call.1} parent=5 // pred_fallthru
        _
    $region6: #{tpu_custom_call.1} parent=1 // loop_footer
      %s19 = sadd.s32 1, %s15
    $region7: #{tpu_custom_call.1} parent=1 // loop_footer_branch
      %14 = sbr.rel target = $region3
    $region8: #{tpu_custom_call.1} parent=1 // loop_exit
      _
    %978 = vsyncpa [#allocation4], 1
    %s979 = scalar_lea.sflag [#allocation4], 1
    %980 = vsyncpa %s979, 1
    %981 = vsyncpa [#allocation5], 1
    %s982 = scalar_lea.sflag [#allocation5], 1
    %983 = vsyncpa %s982, 1
    %984 = vsyncpa [#allocation6], 1
    %s985 = scalar_lea.sflag [#allocation6], 1
    %986 = vsyncpa %s985, 1

</llo_original>
